<compile_context>
chip_gen: v6e
topology: v6e:2x2x1
jax: 0.10.0
libtpu: 0.0.40
codegen_flags: <defaults>
</compile_context>

<pallas_src>
import functools

import jax
import jax.numpy as jnp
from jax.experimental import pallas as pl
from jax.experimental.pallas import tpu as pltpu


def _self_attention_kernel(x_ref, wt_ref, b_ref, att_ref, z_ref, beta_ref,
                           *, M, N, D):
    """x_ref   : (M*N, D)  all views' node embeddings stacked (f32 or bf16)
       wt_ref  : (D, D)    fc weight, pre-transposed in the wrapper
       b_ref   : (1, D)    fc bias (f32)
       att_ref : (1, D)    attention vector, already scaled by 1/N (f32)
       z_ref   : (N, D)    fused embedding (f32)
       beta_ref: (M, 1)    softmax attention weights over views (f32)"""

    x = x_ref[...]                                            # load once, reuse

    # ---- one fused projection + tanh for all M views (MXU, f32 accumulate) --
    h = jnp.dot(x, wt_ref[...], preferred_element_type=jnp.float32)
    h = jnp.tanh(h + b_ref[...])                              # (M*N, D) f32

    # ---- per-view sum over nodes (free sublane split: N % 8 == 0) -----------
    hs = jnp.sum(h.reshape(M, N, D), axis=1)                  # (M, D)

    # ---- scores: VPU multiply + XLU lane reduce (1/N already in att) --------
    s = jnp.sum(hs * att_ref[...], axis=-1, keepdims=True)    # (M, 1)

    # ---- softmax over the M views (exact divide; approx reciprocal would
    #      perturb beta at ~1e-3, not worth it here) --------------------------
    s = s - jnp.max(s, axis=0, keepdims=True)
    e = jnp.exp(s)
    beta = e / jnp.sum(e, axis=0, keepdims=True)              # (M, 1) f32
    beta_ref[...] = beta.astype(beta_ref.dtype)

    # ---- fused embedding: z = sum_m beta_m * h^m  (M broadcast FMAs on the
    #      VPU, reusing the already-resident x; no second input copy) ---------
    xf = x.astype(jnp.float32)
    acc = beta[0:1, :] * xf[0:N, :]
    for m in range(1, M):
        acc = acc + beta[m:m + 1, :] * xf[m * N:(m + 1) * N, :]
    z_ref[...] = acc.astype(z_ref.dtype)


def self_attention_forward(embeds, W, b, att, *, mxu_dtype=jnp.float32):
    """embeds: (M, N, D) stacked view embeddings.

    Returns (z: (N, D) f32, beta: (M,) f32).
    `mxu_dtype=jnp.bfloat16` quantizes only the projection-GEMM operands
    (and the fusion input); all accumulation / elementwise math stays f32.
    """
    M, N, D = embeds.shape
    assert N % 8 == 0, "node count must be a multiple of 8 (sublane tile); pad first"

    x2d = embeds.reshape(M * N, D).astype(mxu_dtype)     # single input copy
    wt = W.T.astype(mxu_dtype)                           # torch Linear: x @ W.T + b
    b2 = b.reshape(1, D).astype(jnp.float32)
    att_s = (att.reshape(1, D) / N).astype(jnp.float32)  # fold the mean's 1/N

    kernel = functools.partial(_self_attention_kernel, M=M, N=N, D=D)
    z, beta = pl.pallas_call(
        kernel,
        out_shape=(
            jax.ShapeDtypeStruct((N, D), jnp.float32),
            jax.ShapeDtypeStruct((M, 1), jnp.float32),
        ),
        in_specs=[
            pl.BlockSpec(memory_space=pltpu.MemorySpace.VMEM),  # x2d
            pl.BlockSpec(memory_space=pltpu.MemorySpace.VMEM),  # W^T
            pl.BlockSpec(memory_space=pltpu.MemorySpace.VMEM),  # b
            pl.BlockSpec(memory_space=pltpu.MemorySpace.VMEM),  # att / N
        ],
        out_specs=(
            pl.BlockSpec(memory_space=pltpu.MemorySpace.VMEM),
            pl.BlockSpec(memory_space=pltpu.MemorySpace.VMEM),
        ),
    )(x2d, wt, b2, att_s)
    return z, beta.reshape(M)


def _reference(embeds, W, b, att):
    """Pure-JAX reference mirroring the PyTorch forward."""
    scores = []
    for i in range(embeds.shape[0]):
        h = jnp.tanh(embeds[i] @ W.T + b)       # fc + tanh
        sp = h.mean(axis=0)                     # (D,)
        scores.append(jnp.dot(att[0], sp))
    w = jnp.stack(scores)
    beta = jax.nn.softmax(w)
    z = jnp.zeros_like(embeds[0])
    for i in range(embeds.shape[0]):
        z = z + embeds[i] * beta[i]
    return z, beta


if __name__ == "__main__":
    hidden_dim = 32   # D
    num_views = 3     # M (len(embeds))
    num_nodes = 16    # N
    attn_drop = 0.0   # dropout -> identity (eval semantics)
    # TODO(synk): the module's `print(self.txt, beta)` side-effect is not reproduced.

    key = jax.random.PRNGKey(0)
    k1, k2, k3, k4 = jax.random.split(key, 4)

    # Deterministic parameter init (xavier_normal_ with gain=1.414 for W and att).
    gain = 1.414
    std_w = gain * (2.0 / (hidden_dim + hidden_dim)) ** 0.5
    W = std_w * jax.random.normal(k1, (hidden_dim, hidden_dim), dtype=jnp.float32)
    bound = 1.0 / (hidden_dim ** 0.5)
    b = jax.random.uniform(k2, (hidden_dim,), jnp.float32, -bound, bound)
    std_a = gain * (2.0 / (1 + hidden_dim)) ** 0.5
    att = std_a * jax.random.normal(k3, (1, hidden_dim), dtype=jnp.float32)

    embeds = jax.random.normal(k4, (num_views, num_nodes, hidden_dim),
                               dtype=jnp.float32)

    z_ref, beta_ref = _reference(embeds, W, b, att)

    # f32 path (exact): strict tolerance.
    z, beta = self_attention_forward(embeds, W, b, att)
    jax.block_until_ready((z, beta))
    assert jnp.allclose(beta, beta_ref, atol=1e-5), "beta mismatch (f32 path)"
    assert jnp.allclose(z, z_ref, atol=1e-5), "z mismatch (f32 path)"

    # bf16-MXU path (v6e/v7x-friendly): operands quantized, accumulation in f32;
    # tolerance relaxed accordingly.
    z16, beta16 = self_attention_forward(embeds, W, b, att,
                                         mxu_dtype=jnp.bfloat16)
    jax.block_until_ready((z16, beta16))
    assert jnp.allclose(beta16, beta_ref, atol=5e-2), "beta mismatch (bf16 path)"
    assert jnp.allclose(z16, z_ref, atol=5e-2), "z mismatch (bf16 path)"

    print("KERNEL_OK")
</pallas_src>

<mosaic_0001>
module attributes {stable_mosaic.version = 11 : i64} {
  func.func @_self_attention_kernel(%arg0: memref<48x32xf32, #tpu.memory_space<vmem>>, %arg1: memref<32x32xf32, #tpu.memory_space<vmem>>, %arg2: memref<1x32xf32, #tpu.memory_space<vmem>>, %arg3: memref<1x32xf32, #tpu.memory_space<vmem>>, %arg4: memref<16x32xf32, #tpu.memory_space<vmem>>, %arg5: memref<3x1xf32, #tpu.memory_space<vmem>>) attributes {dimension_semantics = [], scalar_prefetch = 0 : i64, scratch_operands = 0 : i64, tpu.core_type = #tpu.core_type<tc>} {
    %c0 = arith.constant 0 : index
    %c0_0 = arith.constant 0 : index
    %0 = vector.load %arg0[%c0, %c0_0] : memref<48x32xf32, #tpu.memory_space<vmem>>, vector<48x32xf32>
    %c0_1 = arith.constant 0 : index
    %c0_2 = arith.constant 0 : index
    %1 = vector.load %arg1[%c0_1, %c0_2] : memref<32x32xf32, #tpu.memory_space<vmem>>, vector<32x32xf32>
    %cst = arith.constant dense<0.000000e+00> : vector<48x32xf32>
    %2 = tpu.matmul %0, %1, %cst {dimension_numbers = #tpu.dot_dimension_numbers<[1], [0], [0], [1], [0, 0, 1, 1], [], []>} : vector<48x32xf32>, vector<32x32xf32>, vector<48x32xf32> -> vector<48x32xf32>
    %c0_3 = arith.constant 0 : index
    %c0_4 = arith.constant 0 : index
    %3 = vector.load %arg2[%c0_3, %c0_4] : memref<1x32xf32, #tpu.memory_space<vmem>>, vector<1x32xf32>
    %4 = vector.broadcast %3 : vector<1x32xf32> to vector<48x32xf32>
    %5 = arith.addf %2, %4 : vector<48x32xf32>
    %6 = math.tanh %5 : vector<48x32xf32>
    %7 = vector.shape_cast %6 : vector<48x32xf32> to vector<3x16x32xf32>
    %cst_5 = arith.constant dense<0.000000e+00> : vector<3x32xf32>
    %8 = vector.multi_reduction <add>, %7, %cst_5 [1] : vector<3x16x32xf32> to vector<3x32xf32>
    %c0_6 = arith.constant 0 : index
    %c0_7 = arith.constant 0 : index
    %9 = vector.load %arg3[%c0_6, %c0_7] : memref<1x32xf32, #tpu.memory_space<vmem>>, vector<1x32xf32>
    %10 = vector.broadcast %9 : vector<1x32xf32> to vector<3x32xf32>
    %11 = arith.mulf %8, %10 : vector<3x32xf32>
    %cst_8 = arith.constant dense<0.000000e+00> : vector<3xf32>
    %12 = vector.multi_reduction <add>, %11, %cst_8 [1] : vector<3x32xf32> to vector<3xf32>
    %13 = vector.shape_cast %12 : vector<3xf32> to vector<3x1xf32>
    %cst_9 = arith.constant dense<0xFF800000> : vector<1xf32>
    %14 = vector.multi_reduction <maximumf>, %13, %cst_9 [0] : vector<3x1xf32> to vector<1xf32>
    %15 = vector.shape_cast %14 : vector<1xf32> to vector<1x1xf32>
    %16 = vector.broadcast %15 : vector<1x1xf32> to vector<3x1xf32>
    %17 = arith.subf %13, %16 : vector<3x1xf32>
    %18 = math.exp %17 : vector<3x1xf32>
    %cst_10 = arith.constant dense<0.000000e+00> : vector<1xf32>
    %19 = vector.multi_reduction <add>, %18, %cst_10 [0] : vector<3x1xf32> to vector<1xf32>
    %20 = vector.shape_cast %19 : vector<1xf32> to vector<1x1xf32>
    %21 = vector.broadcast %20 : vector<1x1xf32> to vector<3x1xf32>
    %22 = arith.divf %18, %21 : vector<3x1xf32>
    %c0_11 = arith.constant 0 : index
    %c0_12 = arith.constant 0 : index
    %23 = vector.load %arg5[%c0_11, %c0_12] : memref<3x1xf32, #tpu.memory_space<vmem>>, vector<3x1xf32>
    tpu.vector_store %arg5[%c0_11, %c0_12], %22 {strides = array<i32>} : memref<3x1xf32, #tpu.memory_space<vmem>>, vector<3x1xf32>,
    %24 = vector.extract_strided_slice %22 {offsets = [0, 0], sizes = [1, 1], strides = [1, 1]} : vector<3x1xf32> to vector<1x1xf32>
    %25 = vector.extract_strided_slice %0 {offsets = [0, 0], sizes = [16, 32], strides = [1, 1]} : vector<48x32xf32> to vector<16x32xf32>
    %26 = vector.broadcast %24 : vector<1x1xf32> to vector<16x32xf32>
    %27 = arith.mulf %26, %25 : vector<16x32xf32>
    %28 = vector.extract_strided_slice %22 {offsets = [1, 0], sizes = [1, 1], strides = [1, 1]} : vector<3x1xf32> to vector<1x1xf32>
    %29 = vector.extract_strided_slice %0 {offsets = [16, 0], sizes = [16, 32], strides = [1, 1]} : vector<48x32xf32> to vector<16x32xf32>
    %30 = vector.broadcast %28 : vector<1x1xf32> to vector<16x32xf32>
    %31 = arith.mulf %30, %29 : vector<16x32xf32>
    %32 = arith.addf %27, %31 : vector<16x32xf32>
    %33 = vector.extract_strided_slice %22 {offsets = [2, 0], sizes = [1, 1], strides = [1, 1]} : vector<3x1xf32> to vector<1x1xf32>
    %34 = vector.extract_strided_slice %0 {offsets = [32, 0], sizes = [16, 32], strides = [1, 1]} : vector<48x32xf32> to vector<16x32xf32>
    %35 = vector.broadcast %33 : vector<1x1xf32> to vector<16x32xf32>
    %36 = arith.mulf %35, %34 : vector<16x32xf32>
    %37 = arith.addf %32, %36 : vector<16x32xf32>
    %c0_13 = arith.constant 0 : index
    %c0_14 = arith.constant 0 : index
    %38 = vector.load %arg4[%c0_13, %c0_14] : memref<16x32xf32, #tpu.memory_space<vmem>>, vector<16x32xf32>
    tpu.vector_store %arg4[%c0_13, %c0_14], %37 {strides = array<i32>} : memref<16x32xf32, #tpu.memory_space<vmem>>, vector<16x32xf32>,
    return
  }
}

</mosaic_0001>

<llo_original>
// kernel: tpu_custom_call.1
$region0: #{tpu_custom_call.1}
  #allocation0 [shape = 'u32[]', space=smem, size = 0x4, offset = 0x4, fixed_abs, tag = 'smem constant byte address 0x4 - core index']
  #allocation1 [shape = 'u32[144,128]{1,0:T(1,128)}', space=vmem, size = 0x12000, scoped, tag = 'internal scratch']
  %s0 = inlined_call_operand.vmem [shape: f32[48,32], index: 0, kind: input, shape index: {}]
  %s1 = inlined_call_operand.vmem [shape: f32[32,32], index: 1, kind: input, shape index: {}]
  %s2 = inlined_call_operand.vmem [shape: f32[1,32], index: 2, kind: input, shape index: {}]
  %s3 = inlined_call_operand.vmem [shape: f32[1,32], index: 3, kind: input, shape index: {}]
  %s4 = inlined_call_operand.hbm [shape: f32[16,32], index: 4, kind: output, shape index: {0}]
  %s5 = inlined_call_operand.vmem [shape: f32[3,1], index: 5, kind: output, shape index: {1}]
  %6 = xla_tuple %s4, %s5
  %s7 = sld [smem:[#allocation0]]
  $region34: #{tpu_custom_call.1} parent=0
    _
  %s9 = ssub.s32 1, %s7
  %s10 = scalar_select 0, %s9, %s7
  $region1: #{tpu_custom_call.1} parent=0
    #allocation2 [shape = 'u8[8192]{0}', space=vmem, size = 0x2000, scoped, tag = 'output window, operand 0, single buffered']
    #allocation3 [shape = 's32[1]{0}', space=sflag, size = 0x4, scoped, tag = 'scoped memory for tpu_custom_call.1']
    %11 = vsyncpa [#allocation3], 0
    // Predicated region
    $region2: #{tpu_custom_call.1} parent=1 // pred_check
      _
    $region3: #{tpu_custom_call.1} parent=1 // pred_check_branch
      %13 = sbr.rel (0) target = $region5
    $region4: #{tpu_custom_call.1} parent=1 // pred_region
      _
    $region5: #{tpu_custom_call.1} parent=1 // pred_fallthru
      _
    // Predicated region
    $region6: #{tpu_custom_call.1} parent=1 // pred_check
      _
    $region7: #{tpu_custom_call.1} parent=1 // pred_check_branch
      %15 = sbr.rel (0) target = $region9
    $region8: #{tpu_custom_call.1} parent=1 // pred_region
      _
    $region9: #{tpu_custom_call.1} parent=1 // pred_fallthru
      _
    // Predicated region
    $region10: #{tpu_custom_call.1} parent=1 // pred_check
      _
    $region11: #{tpu_custom_call.1} parent=1 // pred_check_branch
      %17 = sbr.rel (0) target = $region13
    $region12: #{tpu_custom_call.1} parent=1 // pred_region
      _
    $region13: #{tpu_custom_call.1} parent=1 // pred_fallthru
      _
    // Predicated region
    $region14: #{tpu_custom_call.1} parent=1 // pred_check
      _
    $region15: #{tpu_custom_call.1} parent=1 // pred_check_branch
      %19 = sbr.rel (0) target = $region17
    $region16: #{tpu_custom_call.1} parent=1 // pred_region
      _
    $region17: #{tpu_custom_call.1} parent=1 // pred_fallthru
      _
    %v20 = vld [vmem:[%s0] sm:$0xff]
    %v21 = vld [vmem:[%s0 + $0x8] sm:$0xff]
    %v22 = vld [vmem:[%s0 + $0x10] sm:$0xff]
    %v23 = vld [vmem:[%s0 + $0x18] sm:$0xff]
    %v24 = vld [vmem:[%s0 + $0x20] sm:$0xff]
    %v25 = vld [vmem:[%s0 + $0x28] sm:$0xff]
    %v26 = vld [vmem:[%s1] sm:$0xff]
    %v27 = vld [vmem:[%s1 + $0x8] sm:$0xff]
    %v28 = vld [vmem:[%s1 + $0x10] sm:$0xff]
    %v29 = vld [vmem:[%s1 + $0x18] sm:$0xff]
    %v30 = vld [vmem:[%s2] sm:$0x1]
    %v32 = vlaneseq
    %v33 = vshrl.u32 %v32, 7
    %v34 = vsub.s32 0, %v33
    %v35 = vrot.slane %v30, %v34
    %vm37 = vcmask 261120
    %v39 = vsel %vm37, %v20, 0
    %v42 = vsel %vm37, %v21, 0
    %v45 = vsel %vm37, %v22, 0
    %v48 = vsel %vm37, %v23, 0
    %v51 = vsel %vm37, %v24, 0
    %v54 = vsel %vm37, %v25, 0
    %56 = vmatprep.subr.mxu0 0.0
    %57 = vmatpush1.msra.mxu0 0.0
    %58 = vmatprep.subr.mxu0 0.0
    %59 = vmatpush1.msra.mxu0 0.0
    %60 = vmatprep.subr.mxu0 0.0
    %61 = vmatpush1.msra.mxu0 0.0
    %62 = vmatprep.subr.mxu0 0.0
    %63 = vmatpush1.msra.mxu0 0.0
    %64 = vmatprep.subr.mxu0 0.0
    %65 = vmatpush1.msra.mxu0 0.0
    %66 = vmatprep.subr.mxu0 0.0
    %67 = vmatpush1.msra.mxu0 0.0
    %68 = vmatprep.subr.mxu0 0.0
    %69 = vmatpush1.msra.mxu0 0.0
    %70 = vmatprep.subr.mxu0 0.0
    %71 = vmatpush1.msra.mxu0 0.0
    %72 = vmatprep.subr.mxu0 0.0
    %73 = vmatpush1.msra.mxu0 0.0
    %74 = vmatprep.subr.mxu0 0.0
    %75 = vmatpush1.msra.mxu0 0.0
    %76 = vmatprep.subr.mxu0 0.0
    %77 = vmatpush1.msra.mxu0 0.0
    %78 = vmatprep.subr.mxu0 0.0
    %79 = vmatpush1.msra.mxu0 0.0
    %80 = vmatprep.subr.mxu0 0.0
    %81 = vmatpush1.msra.mxu0 %v29
    %82 = vmatprep.subr.mxu0 0.0
    %83 = vmatpush1.msra.mxu0 %v28
    %84 = vmatprep.subr.mxu0 0.0
    %85 = vmatpush1.msra.mxu0 %v27
    %86 = vmatprep.subr.mxu0 0.0
    %87 = vmatpush1.msra.mxu0 %v26
    %88 = vmatprep.subr.mxu0 0.0
    %89 = vmatpush2.msra.mxu0 0.0
    %90 = vmatprep.subr.mxu0 0.0
    %91 = vmatpush2.msra.mxu0 0.0
    %92 = vmatprep.subr.mxu0 0.0
    %93 = vmatpush2.msra.mxu0 0.0
    %94 = vmatprep.subr.mxu0 0.0
    %95 = vmatpush2.msra.mxu0 0.0
    %96 = vmatprep.subr.mxu0 0.0
    %97 = vmatpush2.msra.mxu0 0.0
    %98 = vmatprep.subr.mxu0 0.0
    %99 = vmatpush2.msra.mxu0 0.0
    %100 = vmatprep.subr.mxu0 0.0
    %101 = vmatpush2.msra.mxu0 0.0
    %102 = vmatprep.subr.mxu0 0.0
    %103 = vmatpush2.msra.mxu0 0.0
    %104 = vmatprep.subr.mxu0 0.0
    %105 = vmatpush2.msra.mxu0 0.0
    %106 = vmatprep.subr.mxu0 0.0
    %107 = vmatpush2.msra.mxu0 0.0
    %108 = vmatprep.subr.mxu0 0.0
    %109 = vmatpush2.msra.mxu0 0.0
    %110 = vmatprep.subr.mxu0 0.0
    %111 = vmatpush2.msra.mxu0 0.0
    %112 = vmatprep.subr.mxu0 0.0
    %113 = vmatpush2.msra.mxu0 0.0
    %114 = vmatprep.subr.mxu0 0.0
    %115 = vmatpush2.msra.mxu0 0.0
    %116 = vmatprep.subr.mxu0 0.0
    %117 = vmatpush2.msra.mxu0 0.0
    %118 = vmatprep.subr.mxu0 0.0
    %119 = vmatpush2.msra.mxu0 0.0
    %120 = vmatprep.mubr.f32.mxu0 0.0
    %121 = vmatmul.mubr.f32.gmra.mxu0 %v39
    %v122 = vpop.f32.mrf.mxu0
    %v123 = vadd.f32 %v35, %v122
    %v124 = vpop.f32.mrf.mxu0
    %125 = vmatprep.mubr.f32.mxu0 0.0
    %126 = vmatmul.mubr.f32.gmra.mxu0 %v42
    %v127 = vpop.f32.mrf.mxu0
    %v128 = vadd.f32 %v35, %v127
    %v129 = vpop.f32.mrf.mxu0
    %130 = vmatprep.mubr.f32.mxu0 0.0
    %131 = vmatmul.mubr.f32.gmra.mxu0 %v45
    %v132 = vpop.f32.mrf.mxu0
    %v133 = vadd.f32 %v35, %v132
    %v134 = vpop.f32.mrf.mxu0
    %135 = vmatprep.mubr.f32.mxu0 0.0
    %136 = vmatmul.mubr.f32.gmra.mxu0 %v48
    %v137 = vpop.f32.mrf.mxu0
    %v138 = vadd.f32 %v35, %v137
    %v139 = vpop.f32.mrf.mxu0
    %140 = vmatprep.mubr.f32.mxu0 0.0
    %141 = vmatmul.mubr.f32.gmra.mxu0 %v51
    %v142 = vpop.f32.mrf.mxu0
    %v143 = vadd.f32 %v35, %v142
    %v144 = vpop.f32.mrf.mxu0
    %145 = vmatprep.mubr.f32.mxu0 0.0
    %146 = vmatmul.mubr.f32.gmra.mxu0 %v54
    %v147 = vpop.f32.mrf.mxu0
    %v148 = vadd.f32 %v35, %v147
    %v149 = vpop.f32.mrf.mxu0
    %150 = vdwg.mxu0
    %v151 = vtanh.pop %v123
    %v152 = vtanh.pop %v128
    %v153 = vtanh.pop %v133
    %v154 = vtanh.pop %v138
    %v155 = vtanh.pop %v143
    %v156 = vtanh.pop %v148
    %v157 = vsel %vm37, %v151, 0.0
    %v158 = vsel %vm37, %v152, 0.0
    %v159 = vadd.f32 %v157, %v158
    %v160 = vrot.slane %v159, 4
    %v161 = vadd.f32 %v159, %v160
    %v162 = vrot.slane %v161, 2
    %v163 = vadd.f32 %v161, %v162
    %v164 = vrot.slane %v163, 1
    %v165 = vadd.f32 %v163, %v164
    %v166 = vsel %vm37, %v153, 0.0
    %v167 = vsel %vm37, %v154, 0.0
    %v168 = vadd.f32 %v166, %v167
    %v169 = vrot.slane %v168, 4
    %v170 = vadd.f32 %v168, %v169
    %v171 = vrot.slane %v170, 2
    %v172 = vadd.f32 %v170, %v171
    %v173 = vrot.slane %v172, 1
    %v174 = vadd.f32 %v172, %v173
    %v175 = vsel %vm37, %v155, 0.0
    %v176 = vsel %vm37, %v156, 0.0
    %v177 = vadd.f32 %v175, %v176
    %v178 = vrot.slane %v177, 4
    %v179 = vadd.f32 %v177, %v178
    %v180 = vrot.slane %v179, 2
    %v181 = vadd.f32 %v179, %v180
    %v182 = vrot.slane %v181, 1
    %v183 = vadd.f32 %v181, %v182
    %v184 = vld [vmem:[%s3] sm:$0x1]
    %v186 = vlaneseq
    %v187 = vshrl.u32 %v186, 7
    %v188 = vsub.s32 0, %v187
    %v189 = vrot.slane %v184, %v188
    %v191 = vmul.f32 %v165, %v189
    %v192 = vmul.f32 %v174, %v189
    %v193 = vmul.f32 %v183, %v189
    %v197 = vrot.slane %v192, 7
    %vm198 = vcmask 1041409
    %v199 = vsel %vm198, %v197, %v191
    %v200 = vrot.slane %v193, 6
    %vm201 = vcmask 1042434
    %v202 = vsel %vm201, %v200, %v199
    %vm204 = vcmask 256000
    %v205 = vsel %vm204, %v202, 0.0
    %206 = vadd.xlane.f32.xlu0 %v205
    %v207 = vpop.xlane.xlu0 %206
    %vm208 = vcmask 1042432
    %v209 = vsel %vm208, %v207, -inf
    %v210 = vrot.slane %v209, 4
    %v211 = vmax.f32 %v209, %v210
    %v212 = vrot.slane %v211, 2
    %v213 = vmax.f32 %v211, %v212
    %v214 = vrot.slane %v213, 1
    %v215 = vmax.f32 %v213, %v214
    %v216 = vsub.f32 %v207, %v215
    %v217 = vmul.f32 %v216, 1.442695
    %v218 = vpow.pop %v217
    %v219 = vsel %vm208, %v218, 0.0
    %v220 = vrot.slane %v219, 4
    %v221 = vadd.f32 %v219, %v220
    %v222 = vrot.slane %v221, 2
    %v223 = vadd.f32 %v221, %v222
    %v224 = vrot.slane %v223, 1
    %v225 = vadd.f32 %v223, %v224
    %v226 = vrcp.pop %v225
    %v227 = vmul.f32 %v218, %v226
    %vm228 = vcmask 2048
    %229 = vst.msk [vmem:[%s5] sm:$0x7] %vm228, %v227
    %v230 = vlaneseq
    %v231 = vshrl.u32 %v230, 7
    %v232 = vsub.s32 0, %v231
    %v233 = vrot.slane %v227, %v232
    %v234 = vmul.f32 %v233, %v20
    %v235 = vmul.f32 %v233, %v21
    %v236 = vlaneseq
    %v237 = vshrl.u32 %v236, 7
    %v238 = vsub.s32 1, %v237
    %v239 = vrot.slane %v227, %v238
    %v240 = vmul.f32 %v239, %v22
    %v241 = vmul.f32 %v239, %v23
    %v242 = vadd.f32 %v234, %v240
    %v243 = vadd.f32 %v235, %v241
    %v244 = vlaneseq
    %v245 = vshrl.u32 %v244, 7
    %v246 = vsub.s32 2, %v245
    %v247 = vrot.slane %v227, %v246
    %v248 = vmul.f32 %v247, %v24
    %v249 = vmul.f32 %v247, %v25
    %v250 = vadd.f32 %v242, %v248
    %v251 = vadd.f32 %v243, %v249
    %252 = vst.msk [vmem:[#allocation2] sm:$0xff] %vm37, %v250
    %253 = vst.msk [vmem:[#allocation2 + $0x8] sm:$0xff] %vm37, %v251
    // Predicated region
    $region18: #{tpu_custom_call.1} parent=1 // pred_check
      _
    $region19: #{tpu_custom_call.1} parent=1 // pred_check_branch
      %255 = sbr.rel (0) target = $region21
    $region20: #{tpu_custom_call.1} parent=1 // pred_region
      %s257 = ssub.s32 256, 256
      %258 = vsyncadd [#allocation3], %s257
      %s259 = sshll.u32 [#allocation2], 4
      %s260 = int_to_ptr.vmem [resolvable:$true] %s259
      %265 = dma.vmem_to_hbm [thread:$0]  %s260, 256, %s4, [#allocation3], 128, 128, 8
    $region21: #{tpu_custom_call.1} parent=1 // pred_fallthru
      _
    // Predicated region
    $region22: #{tpu_custom_call.1} parent=1 // pred_check
      _
    $region23: #{tpu_custom_call.1} parent=1 // pred_check_branch
      %267 = sbr.rel (0) target = $region25
    $region24: #{tpu_custom_call.1} parent=1 // pred_region
      _
    $region25: #{tpu_custom_call.1} parent=1 // pred_fallthru
      _
    // Predicated region
    $region26: #{tpu_custom_call.1} parent=1 // pred_check
      _
    $region27: #{tpu_custom_call.1} parent=1 // pred_check_branch
      %269 = sbr.rel (0) target = $region29
    $region28: #{tpu_custom_call.1} parent=1 // pred_region
      %270 = dma.done [#allocation3], 256
    $region29: #{tpu_custom_call.1} parent=1 // pred_fallthru
      _
    // Predicated region
    $region30: #{tpu_custom_call.1} parent=1 // pred_check
      _
    $region31: #{tpu_custom_call.1} parent=1 // pred_check_branch
      %272 = sbr.rel (0) target = $region33
    $region32: #{tpu_custom_call.1} parent=1 // pred_region
      _
    $region33: #{tpu_custom_call.1} parent=1 // pred_fallthru
      _
    %273 = vsyncpa [#allocation3], 1

</llo_original>
